<compile_context>
chip_gen: v7x
topology: tpu7x:2x2x1
jax: 0.10.0
libtpu: 0.0.40
codegen_flags: <defaults>
</compile_context>

<pallas_src>
import functools

import numpy as np
import jax
import jax.numpy as jnp
from jax import lax
from jax.experimental import pallas as pl
from jax.experimental.pallas import tpu as pltpu


def _round_up(x: int, m: int) -> int:
    return ((x + m - 1) // m) * m


# ----------------------------- Pallas kernels -------------------------------

def _linear_kernel(x_ref, w_ref, b_ref, o_ref, acc_ref):
    """One (tn, tv) output tile, reduced over the K grid axis."""
    k = pl.program_id(2)

    @pl.when(k == 0)
    def _():
        acc_ref[...] = jnp.zeros_like(acc_ref)

    acc_ref[...] += jnp.dot(x_ref[...], w_ref[...],
                            preferred_element_type=jnp.float32)

    @pl.when(k == pl.num_programs(2) - 1)
    def _():
        o_ref[...] = acc_ref[...] + b_ref[...]


def linear_forward(x, w, b, *, tile_n=256, tile_v=512, tile_k=512):
    """x: (N, K), w: (K, V), b: (1, V) -> (N, V) f32.

    bf16 operands, f32 accumulation, K tiled with a VMEM accumulator.
    """
    N, K = x.shape
    V = w.shape[1]
    x = x.astype(jnp.bfloat16)
    w = w.astype(jnp.bfloat16)
    b = b.astype(jnp.float32)

    tn = min(tile_n, _round_up(N, 8))
    tv = min(tile_v, _round_up(V, 128))
    tk = min(tile_k, _round_up(K, 128))

    # v7x has 2 TensorCores: make sure the parallel grid has >= 2 blocks when
    # the problem permits, so work can be sharded across both cores.
    if (_round_up(N, tn) // tn) * (_round_up(V, tv) // tv) < 2:
        if _round_up(V, 128) >= 256:
            tv = _round_up(_round_up(V, 128) // 2, 128)
        elif _round_up(N, 8) >= 16:
            tn = _round_up(_round_up(N, 8) // 2, 8)

    Np = _round_up(N, tn)
    Vp = _round_up(V, tv)
    Kp = _round_up(K, tk)
    if Np != N or Kp != K:
        x = jnp.pad(x, ((0, Np - N), (0, Kp - K)))
    if Kp != K or Vp != V:
        w = jnp.pad(w, ((0, Kp - K), (0, Vp - V)))
    if Vp != V:
        b = jnp.pad(b, ((0, 0), (0, Vp - V)))

    # VMEM budget: double-buffered blocks + accumulator, sized for v7x (64 MiB).
    est = 2 * (tn * tk * 2 + tk * tv * 2 + tv * 4 + tn * tv * 4) + tn * tv * 4
    vmem_limit = int(min(max(4 * est, 8 << 20), 64 << 20))

    out = pl.pallas_call(
        _linear_kernel,
        out_shape=jax.ShapeDtypeStruct((Np, Vp), jnp.float32),
        grid=(Np // tn, Vp // tv, Kp // tk),
        in_specs=[pl.BlockSpec((tn, tk), lambda i, j, k: (i, k)),
                  pl.BlockSpec((tk, tv), lambda i, j, k: (k, j)),
                  pl.BlockSpec((1, tv), lambda i, j, k: (0, j))],
        out_specs=pl.BlockSpec((tn, tv), lambda i, j, k: (i, j)),
        scratch_shapes=[pltpu.VMEM((tn, tv), jnp.float32)],
        compiler_params=pltpu.CompilerParams(
            dimension_semantics=("parallel", "parallel", "arbitrary"),
            vmem_limit_bytes=vmem_limit),
    )(x, w, b)
    if Np != N or Vp != V:
        out = out[:N, :V]
    return out


def _lstm_cell(xg, whh_bf16, h, c, Hp):
    """One LSTM step. xg: (Bp, 4*Hp) f32 precomputed x@W_ih + b (gate-blocked).

    h @ W_hh runs on the MXU in bf16 with f32 accumulation; gate math stays f32
    (no bf16 VPU/EUP on v5e).  Gate lane-blocks are 128-aligned -> free slices.
    """
    gates = xg + jnp.dot(h.astype(jnp.bfloat16), whh_bf16,
                         preferred_element_type=jnp.float32)
    i = jax.nn.sigmoid(gates[:, 0 * Hp:1 * Hp])
    f = jax.nn.sigmoid(gates[:, 1 * Hp:2 * Hp])
    g = jnp.tanh(gates[:, 2 * Hp:3 * Hp])
    o = jax.nn.sigmoid(gates[:, 3 * Hp:4 * Hp])
    c_new = f * c + i * g
    h_new = o * jnp.tanh(c_new)
    return h_new, c_new


def _encoder_lstm_kernel(xg_ref, whh_ref, h_ref, c_ref, *, t_valid, mask_tail):
    """Encoder recurrence, streamed over time-blocks of TT steps.

    xg_ref : (TT, Bp, 4*Hp) block for this grid step.
    h_ref/c_ref : (Bp, Hp) resident output blocks -> carry across grid steps.
    """
    TT, Bp, G = xg_ref.shape
    Hp = G // 4
    t_blk = pl.program_id(0)

    @pl.when(t_blk == 0)
    def _():
        h_ref[...] = jnp.zeros_like(h_ref)
        c_ref[...] = jnp.zeros_like(c_ref)

    whh = whh_ref[...]

    def body(s, carry):
        h, c = carry
        h_new, c_new = _lstm_cell(xg_ref[s], whh, h, c, Hp)
        if mask_tail:
            valid = (t_blk * TT + s) < t_valid
            h_new = jnp.where(valid, h_new, h)
            c_new = jnp.where(valid, c_new, c)
        return h_new, c_new

    h, c = lax.fori_loop(0, TT, body, (h_ref[...], c_ref[...]), unroll=True)
    h_ref[...] = h
    c_ref[...] = c


def _decoder_lstm_kernel(xg_ref, whh_ref, h0_ref, c0_ref, states_ref,
                         h_sc, c_sc):
    """Decoder recurrence, streamed over time-blocks; states written per block."""
    TT, Bp, G = xg_ref.shape
    Hp = G // 4
    t_blk = pl.program_id(0)

    @pl.when(t_blk == 0)
    def _():
        h_sc[...] = h0_ref[...]
        c_sc[...] = c0_ref[...]

    whh = whh_ref[...]

    def body(s, carry):
        h, c = carry
        h, c = _lstm_cell(xg_ref[s], whh, h, c, Hp)
        states_ref[s] = h
        return h, c

    h, c = lax.fori_loop(0, TT, body, (h_sc[...], c_sc[...]), unroll=True)
    h_sc[...] = h
    c_sc[...] = c


def _lstm_vmem_limit(TT, Bp, Hp):
    xg = TT * Bp * 4 * Hp * 4
    whh = Hp * 4 * Hp * 2
    st = TT * Bp * Hp * 4
    hc = Bp * Hp * 4
    est = 2 * (xg + whh + st + 4 * hc) + 2 * hc
    return int(min(max(4 * est, 8 << 20), 64 << 20))


def encoder_lstm(enc_xg, whh, *, t_valid, TT):
    """enc_xg: (T_in_p, Bp, 4*Hp) f32, whh: (Hp, 4*Hp) bf16 -> final (h, c)."""
    Tp, Bp, G = enc_xg.shape
    Hp = G // 4
    kernel = functools.partial(_encoder_lstm_kernel, t_valid=t_valid,
                               mask_tail=(Tp != t_valid))
    h, c = pl.pallas_call(
        kernel,
        out_shape=(jax.ShapeDtypeStruct((Bp, Hp), jnp.float32),
                   jax.ShapeDtypeStruct((Bp, Hp), jnp.float32)),
        grid=(Tp // TT,),
        in_specs=[pl.BlockSpec((TT, Bp, G), lambda t: (t, 0, 0)),
                  pl.BlockSpec((Hp, G), lambda t: (0, 0))],
        out_specs=(pl.BlockSpec((Bp, Hp), lambda t: (0, 0)),
                   pl.BlockSpec((Bp, Hp), lambda t: (0, 0))),
        compiler_params=pltpu.CompilerParams(
            dimension_semantics=("arbitrary",),
            vmem_limit_bytes=_lstm_vmem_limit(TT, Bp, Hp)),
    )(enc_xg, whh)
    return h, c


def decoder_lstm(dec_xg, whh, h0, c0, *, TT):
    """dec_xg: (T_out_p, Bp, 4*Hp) f32 -> decoder states (T_out_p, Bp, Hp)."""
    Tp, Bp, G = dec_xg.shape
    Hp = G // 4
    states = pl.pallas_call(
        _decoder_lstm_kernel,
        out_shape=jax.ShapeDtypeStruct((Tp, Bp, Hp), jnp.float32),
        grid=(Tp // TT,),
        in_specs=[pl.BlockSpec((TT, Bp, G), lambda t: (t, 0, 0)),
                  pl.BlockSpec((Hp, G), lambda t: (0, 0)),
                  pl.BlockSpec((Bp, Hp), lambda t: (0, 0)),
                  pl.BlockSpec((Bp, Hp), lambda t: (0, 0))],
        out_specs=pl.BlockSpec((TT, Bp, Hp), lambda t: (t, 0, 0)),
        scratch_shapes=[pltpu.VMEM((Bp, Hp), jnp.float32),
                        pltpu.VMEM((Bp, Hp), jnp.float32)],
        compiler_params=pltpu.CompilerParams(
            dimension_semantics=("arbitrary",),
            vmem_limit_bytes=_lstm_vmem_limit(TT, Bp, Hp)),
    )(dec_xg, whh, h0, c0)
    return states


# --------------------------- device-side forward ----------------------------

def _device_forward(params, input_seqs, output_seqs, *, V, padding_idx, TT):
    """Everything that can run fixed-shape on device, as one jitted program."""
    B, T_out = output_seqs.shape
    T_in = input_seqs.shape[1]
    Hp = params["enc_whh"].shape[0]
    Vp = params["lin_w"].shape[1]
    Bp = _round_up(B, 8)
    T_in_p = _round_up(T_in, TT)
    T_out_p = _round_up(T_out, TT)

    # --- sequence preprocessing (mirrors the python loops in the torch code) ---
    pos = jnp.arange(T_out)[None, :]
    wo_end = jnp.where((pos >= 1) & (output_seqs == 1), 0, output_seqs)
    wo_start = jnp.concatenate(
        [output_seqs[:, 1:], jnp.zeros((B, 1), output_seqs.dtype)], axis=1)

    # --- pad batch to sublanes, time to TT blocks; time-major token ids ---
    in_ids = jnp.pad(input_seqs, ((0, Bp - B), (0, T_in_p - T_in))).T      # (T_in_p, Bp)
    dec_ids = jnp.pad(wo_end, ((0, Bp - B), (0, T_out_p - T_out)),
                      constant_values=padding_idx).T                       # (T_out_p, Bp)

    # --- x@W_ih + b as a table lookup (emb_ih precomputed once at init) ---
    enc_xg = jnp.take(params["enc_emb_ih"], in_ids, axis=0)                # (T_in_p, Bp, 4Hp)
    dec_xg = jnp.take(params["dec_emb_ih"], dec_ids, axis=0)               # (T_out_p, Bp, 4Hp)

    # --- streamed encoder + decoder recurrence (h/c stay in VMEM) ---
    h, c = encoder_lstm(enc_xg, params["enc_whh"], t_valid=T_in, TT=TT)
    states = decoder_lstm(dec_xg, params["dec_whh"], h, c, TT=TT)          # (T_out_p, Bp, Hp)

    # --- output projection: slice to real (B, T_out) first, emit batch-major ---
    states_bm = states[:T_out, :B].transpose(1, 0, 2)                      # (B, T_out, Hp)
    logits_p = linear_forward(states_bm.reshape(B * T_out, Hp),
                              params["lin_w"], params["lin_b"])
    logits = logits_p.reshape(B, T_out, Vp)[:, :, :V]

    # per-sequence valid lengths (pack/pad_packed_sequence semantics)
    lens = jnp.sum(wo_end != padding_idx, axis=1)
    return logits, wo_start, lens


# ------------------------------ Seq2Seq model -------------------------------

class Seq2SeqPallas:
    """JAX/Pallas re-implementation of Seq2Seq.forward (standard path).

    encoder : Embedding(input_vocab, H) + LSTM(H, H)  -> (h, c)
    decoder : Embedding(output_vocab, H, padding_idx) + LSTM(H, H) init from encoder
    linear  : Linear(H, output_vocab)

    Parameters are stored pre-padded to TPU tile shapes (H -> Hp mult of 128,
    V -> Vp mult of 128, each LSTM gate in its own Hp-wide lane block) with
    ZERO padding — that zero-padding invariant is what keeps padded lanes /
    batch rows from contaminating real outputs.  Matmul weights are bf16.
    """

    TT = 8  # time steps per LSTM grid block (amortizes per-grid-step overhead)

    def __init__(self, input_vocab_size, output_vocab_size, hidden_size,
                 padding_idx, key):
        self.H = hidden_size
        self.V = output_vocab_size
        self.padding_idx = padding_idx

        H = hidden_size
        Hp = _round_up(H, 128)
        Vp = _round_up(output_vocab_size, 128)
        self.Hp, self.Vp = Hp, Vp

        ks = jax.random.split(key, 10)
        s = 0.1

        def nrm(k, shape):
            return (s * jax.random.normal(k, shape)).astype(jnp.float32)

        def pad_gate_w(w):          # (H, 4H) -> (Hp, 4Hp), gate-blocked, zeros
            out = jnp.zeros((Hp, 4 * Hp), jnp.float32)
            for g in range(4):
                out = out.at[:H, g * Hp:g * Hp + H].set(w[:, g * H:(g + 1) * H])
            return out

        def pad_gate_b(b):          # (1, 4H) -> (1, 4Hp), gate-blocked, zeros
            out = jnp.zeros((1, 4 * Hp), jnp.float32)
            for g in range(4):
                out = out.at[:, g * Hp:g * Hp + H].set(b[:, g * H:(g + 1) * H])
            return out

        enc_emb = nrm(ks[0], (input_vocab_size, H))
        enc_wih = nrm(ks[1], (H, 4 * H))            # W_ih^T, gate order i,f,g,o
        enc_whh = nrm(ks[2], (H, 4 * H))            # W_hh^T
        enc_b = nrm(ks[3], (1, 4 * H))              # b_ih + b_hh combined
        dec_emb = nrm(ks[4], (output_vocab_size, H)).at[padding_idx].set(0.0)
        dec_wih = nrm(ks[5], (H, 4 * H))
        dec_whh = nrm(ks[6], (H, 4 * H))
        dec_b = nrm(ks[7], (1, 4 * H))
        lin_w = nrm(ks[8], (H, output_vocab_size))  # W^T
        lin_b = nrm(ks[9], (1, output_vocab_size))

        # One-time precompute (outside the hot path): emb_ih = emb @ W_ih + b,
        # shape (vocab, 4*Hp).  Replaces the per-token X@W_ih hot-path matmul
        # with a gather (vocab << T*B here).
        enc_emb_p = jnp.pad(enc_emb, ((0, 0), (0, Hp - H)))
        dec_emb_p = jnp.pad(dec_emb, ((0, 0), (0, Hp - H)))
        enc_emb_ih = linear_forward(enc_emb_p,
                                    pad_gate_w(enc_wih).astype(jnp.bfloat16),
                                    pad_gate_b(enc_b))
        dec_emb_ih = linear_forward(dec_emb_p,
                                    pad_gate_w(dec_wih).astype(jnp.bfloat16),
                                    pad_gate_b(dec_b))

        self.params = dict(
            enc_emb_ih=enc_emb_ih,                                         # f32 (Vin, 4Hp)
            dec_emb_ih=dec_emb_ih,                                         # f32 (Vout, 4Hp)
            enc_whh=pad_gate_w(enc_whh).astype(jnp.bfloat16),              # bf16 (Hp, 4Hp)
            dec_whh=pad_gate_w(dec_whh).astype(jnp.bfloat16),              # bf16 (Hp, 4Hp)
            lin_w=jnp.pad(lin_w, ((0, Hp - H),
                                  (0, Vp - output_vocab_size))).astype(jnp.bfloat16),
            lin_b=jnp.pad(lin_b, ((0, 0), (0, Vp - output_vocab_size))),   # f32 (1, Vp)
        )

        self._fwd = jax.jit(functools.partial(
            _device_forward, V=output_vocab_size, padding_idx=padding_idx,
            TT=self.TT))

    def forward(self, input_seqs, output_seqs):
        B = output_seqs.shape[0]
        logits, wo_start, lens = self._fwd(self.params, input_seqs, output_seqs)
        # Single host sync at the very end; the variable-length concatenation
        # mirrors the torch.cat loop over per-sequence lengths.
        lens_np = np.asarray(jax.device_get(lens))
        flattened_pred = jnp.concatenate(
            [logits[i, :int(lens_np[i])] for i in range(B)], axis=0)
        flattened_targets = jnp.concatenate(
            [wo_start[i, :int(lens_np[i])] for i in range(B)], axis=0)
        return flattened_pred, flattened_targets


# ---------------------------------- main -------------------------------------

if __name__ == "__main__":
    key = jax.random.PRNGKey(0)
    k_params, k_in = jax.random.split(key)

    B, T_in, T_out = 2, 8, 8
    input_vocab, output_vocab, hidden, pad_idx = 16, 12, 32, 0

    model = Seq2SeqPallas(input_vocab_size=input_vocab,
                          output_vocab_size=output_vocab,
                          hidden_size=hidden,
                          padding_idx=pad_idx,
                          key=k_params)

    # input sequences: random token ids (>= 2 so no pad/eos)
    input_seqs = jax.random.randint(k_in, (B, T_in), 2, input_vocab,
                                    dtype=jnp.int32)
    # output sequences: BOS=2, tokens, EOS=1, padding=0
    output_seqs = jnp.array([[2, 5, 7, 3, 4, 1, 0, 0],
                             [2, 6, 8, 1, 0, 0, 0, 0]], dtype=jnp.int32)

    flattened_pred, flattened_targets = model.forward(input_seqs, output_seqs)
    jax.block_until_ready(flattened_pred)
    jax.block_until_ready(flattened_targets)

    assert flattened_pred.shape == (5 + 3, output_vocab)
    assert flattened_targets.shape == (5 + 3,)
    print("KERNEL_OK")
</pallas_src>

<mosaic_0001>
module attributes {stable_mosaic.version = 11 : i64} {
  func.func @_linear_kernel(%arg0: i32, %arg1: i32, %arg2: i32, %arg3: memref<16x128xbf16, #tpu.memory_space<vmem>>, %arg4: memref<128x256xbf16, #tpu.memory_space<vmem>>, %arg5: memref<1x256xf32, #tpu.memory_space<vmem>>, %arg6: memref<16x256xf32, #tpu.memory_space<vmem>>, %arg7: memref<16x256xf32, #tpu.memory_space<vmem>>) attributes {dimension_semantics = [#tpu.dimension_semantics<parallel>, #tpu.dimension_semantics<parallel>, #tpu.dimension_semantics<arbitrary>], iteration_bounds = array<i64: 1, 2, 1>, scalar_prefetch = 0 : i64, scratch_operands = 1 : i64, tpu.core_type = #tpu.core_type<tc>, window_params = [{transform_indices = @transform_0, window_bounds = array<i64: 16, 128>}, {transform_indices = @transform_1, window_bounds = array<i64: 128, 256>}, {transform_indices = @transform_2, window_bounds = array<i64: 1, 256>}, {transform_indices = @transform_3, window_bounds = array<i64: 16, 256>}]} {
    %c0_i32 = arith.constant 0 : i32
    %0 = arith.cmpi eq, %arg2, %c0_i32 : i32
    %1 = arith.extui %0 : i1 to i32
    %c0_i32_0 = arith.constant 0 : i32
    %2 = arith.cmpi ne, %1, %c0_i32_0 : i32
    scf.if %2 {
      %cst_10 = arith.constant 0.000000e+00 : f32
      %12 = vector.broadcast %cst_10 : f32 to vector<16x256xf32>
      %c0_11 = arith.constant 0 : index
      %c0_12 = arith.constant 0 : index
      %13 = vector.load %arg7[%c0_11, %c0_12] : memref<16x256xf32, #tpu.memory_space<vmem>>, vector<16x256xf32>
      tpu.vector_store %arg7[%c0_11, %c0_12], %12 {strides = array<i32>} : memref<16x256xf32, #tpu.memory_space<vmem>>, vector<16x256xf32>,
    } else {
    }
    %c0 = arith.constant 0 : index
    %c0_1 = arith.constant 0 : index
    %3 = vector.load %arg7[%c0, %c0_1] : memref<16x256xf32, #tpu.memory_space<vmem>>, vector<16x256xf32>
    %c0_2 = arith.constant 0 : index
    %c0_3 = arith.constant 0 : index
    %4 = vector.load %arg3[%c0_2, %c0_3] : memref<16x128xbf16, #tpu.memory_space<vmem>>, vector<16x128xbf16>
    %c0_4 = arith.constant 0 : index
    %c0_5 = arith.constant 0 : index
    %5 = vector.load %arg4[%c0_4, %c0_5] : memref<128x256xbf16, #tpu.memory_space<vmem>>, vector<128x256xbf16>
    %cst = arith.constant dense<0.000000e+00> : vector<16x256xf32>
    %6 = tpu.matmul %4, %5, %cst {dimension_numbers = #tpu.dot_dimension_numbers<[1], [0], [0], [1], [0, 0, 1, 1], [], []>} : vector<16x128xbf16>, vector<128x256xbf16>, vector<16x256xf32> -> vector<16x256xf32>
    %7 = arith.addf %3, %6 : vector<16x256xf32>
    %c0_6 = arith.constant 0 : index
    %c0_7 = arith.constant 0 : index
    %8 = vector.load %arg7[%c0_6, %c0_7] : memref<16x256xf32, #tpu.memory_space<vmem>>, vector<16x256xf32>
    tpu.vector_store %arg7[%c0_6, %c0_7], %7 {strides = array<i32>} : memref<16x256xf32, #tpu.memory_space<vmem>>, vector<16x256xf32>,
    %c0_i32_8 = arith.constant 0 : i32
    %9 = arith.cmpi eq, %arg2, %c0_i32_8 : i32
    %10 = arith.extui %9 : i1 to i32
    %c0_i32_9 = arith.constant 0 : i32
    %11 = arith.cmpi ne, %10, %c0_i32_9 : i32
    scf.if %11 {
      %c0_10 = arith.constant 0 : index
      %c0_11 = arith.constant 0 : index
      %12 = vector.load %arg7[%c0_10, %c0_11] : memref<16x256xf32, #tpu.memory_space<vmem>>, vector<16x256xf32>
      %c0_12 = arith.constant 0 : index
      %c0_13 = arith.constant 0 : index
      %13 = vector.load %arg5[%c0_12, %c0_13] : memref<1x256xf32, #tpu.memory_space<vmem>>, vector<1x256xf32>
      %14 = vector.broadcast %13 : vector<1x256xf32> to vector<16x256xf32>
      %15 = arith.addf %12, %14 : vector<16x256xf32>
      %c0_14 = arith.constant 0 : index
      %c0_15 = arith.constant 0 : index
      %16 = vector.load %arg6[%c0_14, %c0_15] : memref<16x256xf32, #tpu.memory_space<vmem>>, vector<16x256xf32>
      tpu.vector_store %arg6[%c0_14, %c0_15], %15 {strides = array<i32>} : memref<16x256xf32, #tpu.memory_space<vmem>>, vector<16x256xf32>,
    } else {
    }
    return
  }
  func.func @transform_0(%arg0: i32, %arg1: i32, %arg2: i32) -> (i32, i32) {
    %c0_i32 = arith.constant 0 : i32
    return %arg0, %arg2 : i32, i32
  }
  func.func @transform_1(%arg0: i32, %arg1: i32, %arg2: i32) -> (i32, i32) {
    %c0_i32 = arith.constant 0 : i32
    return %arg2, %arg1 : i32, i32
  }
  func.func @transform_2(%arg0: i32, %arg1: i32, %arg2: i32) -> (i32, i32) {
    %c0_i32 = arith.constant 0 : i32
    %c0_i32_0 = arith.constant 0 : i32
    return %c0_i32, %arg1 : i32, i32
  }
  func.func @transform_3(%arg0: i32, %arg1: i32, %arg2: i32) -> (i32, i32) {
    %c0_i32 = arith.constant 0 : i32
    return %arg0, %arg1 : i32, i32
  }
}

</mosaic_0001>

<llo_original>
// kernel: tpu_custom_call.1
$region0: #{tpu_custom_call.1}
  #allocation0 [shape = 'u32[]', space=smem, size = 0x4, offset = 0x4, fixed_abs, tag = 'smem constant byte address 0x4 - core index']
  #allocation1 [shape = 'u32[144,128]{1,0:T(1,128)}', space=vmem, size = 0x12000, scoped, tag = 'internal scratch']
  #allocation2 [shape = 'f32[16,256]{1,0:T(8,128)}', space=vmem, size = 0x4000, scoped, tag = 'scratch operand']
  %s0 = inlined_call_operand.hbm [shape: bf16[16,128], index: 0, kind: input, shape index: {}]
  %s1 = inlined_call_operand.hbm [shape: bf16[128,512], index: 1, kind: input, shape index: {}]
  %s2 = inlined_call_operand.vmem [shape: f32[1,512], index: 2, kind: input, shape index: {}]
  %s3 = inlined_call_operand.hbm [shape: f32[16,512], index: 3, kind: output, shape index: {}]
  %s4 = sld [smem:[#allocation0]]
  $region61: #{tpu_custom_call.1} parent=0
    _
  %s6 = ssub.s32 1, %s4
  %s7 = scalar_select 0, %s6, %s4
  $region1: #{tpu_custom_call.1} parent=0
    #allocation3 [shape = 'u8[4096]{0}', space=vmem, size = 0x1000, scoped, tag = 'input window, operand 0, single buffered']
    #allocation4 [shape = 's32[2]{0}', space=sflag, size = 0x8, scoped, tag = 'scoped memory for tpu_custom_call.1']
    #allocation5 [shape = 's32[2]{0}', space=sflag, size = 0x8, scoped, tag = 'scoped memory for tpu_custom_call.1']
    #allocation6 [shape = 'u8[131072]{0}', space=vmem, size = 0x20000, scoped, tag = 'input window, operand 1']
    #allocation7 [shape = 's32[2]{0}', space=sflag, size = 0x8, scoped, tag = 'scoped memory for tpu_custom_call.1']
    #allocation8 [shape = 'u8[32768]{0}', space=vmem, size = 0x8000, scoped, tag = 'output window, operand 0']
    %8 = vsyncpa [#allocation4], 0
    %9 = vsyncpa [#allocation7], 0
    %s10 = scalar_lea.sflag [#allocation7], 1
    %11 = vsyncpa %s10, 0
    %12 = vsyncpa [#allocation5], 0
    %s13 = scalar_lea.sflag [#allocation5], 1
    %14 = vsyncpa %s13, 0
    loop: start=0, step=1, limit=4
    $region2: #{tpu_custom_call.1} parent=1 // loop_pre_header
      _
    $region3: #{tpu_custom_call.1} parent=1 // loop_header
      %s16 = sphi 0, %s20
      %p17 = scmp.ge.s32.totalorder %s16, 4
      %s23 = sphi 0, %s42
      %s24 = sphi 0, %s38
      %s25 = sphi 0, %s34
      %s26 = sphi 0, %s23
      %s27 = sphi 0, %s24
      %s28 = sphi 0, %s25
      %s29 = sphi 0, %s26
      %s30 = sphi 0, %s27
      %s31 = sphi 0, %s28
      %s47 = sphi 0, %s49
      %s50 = sphi 0, %s47
      %s51 = sphi 0, %s50
      %s67 = sphi 0, %s51
      %s75 = sphi 0, %s77
      %s78 = sphi 0, %s75
      %s79 = sphi 0, %s78
      %s95 = sphi 0, %s79
      %s101 = sphi 0, %s103
      %s104 = sphi 0, %s101
      %s105 = sphi 0, %s104
      %s121 = sphi 0, %s105
      %s129 = sphi 0, %s131
      %s132 = sphi 0, %s129
      %s133 = sphi 0, %s132
      %s149 = sphi 0, %s133
    $region4: #{tpu_custom_call.1} parent=1 // loop_header_branch
      %19 = sbr.rel (%p17) target = $region8
    $region5: #{tpu_custom_call.1} parent=1 // loop_body
      %s21 = ssub.s32 %s16, 1
      %s22 = ssub.s32 %s16, 2
      %s32 = sadd.s32 1, %s25
      %p33 = scmp.ge.s32.totalorder %s32, 1
      %s34 = scalar_select %p33, 0, %s32
      %s35 = sadd.s32 1, %s24
      %s36 = scalar_select %p33, %s35, %s24
      %p37 = scmp.ge.s32.totalorder %s36, 2
      %s38 = scalar_select %p37, 0, %s36
      %s39 = sadd.s32 1, %s23
      %s40 = scalar_select %p37, %s39, %s23
      %p41 = scmp.ge.s32.totalorder %s40, 1
      %s42 = scalar_select %p41, 0, %s40
      %s43 = ssub.s32 %s23, %s42
      %s44 = ssub.s32 %s25, %s34
      %s45 = sor.u32 %s43, %s44
      %p46 = scmp.eq.s32.totalorder %s45, 0
      %s48 = sadd.s32 %s47, 1
      %s49 = scalar_select %p46, %s47, %s48
      %p52 = pneg %p46
      %p53 = scmp.eq.s32.totalorder %s16, 1
      %p54 = por %p52, %p53
      %p55 = scmp.ne.s32.totalorder %s47, %s50
      %p56 = scmp.eq.s32.totalorder %s16, 0
      %p57 = por %p55, %p56
      %p58 = scmp.ne.s32.totalorder %s47, %s50
      %p59 = scmp.eq.s32.totalorder %s21, 1
      %p60 = por %p58, %p59
      %p61 = scmp.ne.s32.totalorder %s50, %s51
      %p62 = scmp.eq.s32.totalorder %s21, 0
      %p63 = por %p61, %p62
      %p64 = scmp.ne.s32.totalorder %s50, %s51
      %p65 = scmp.eq.s32.totalorder %s22, 1
      %p66 = por %p64, %p65
      %p68 = scmp.ne.s32.totalorder %s51, %s67
      %p69 = scmp.eq.s32.totalorder %s22, 0
      %p70 = por %p68, %p69
      %s71 = ssub.s32 %s25, %s34
      %s72 = ssub.s32 %s24, %s38
      %s73 = sor.u32 %s71, %s72
      %p74 = scmp.eq.s32.totalorder %s73, 0
      %s76 = sadd.s32 %s75, 1
      %s77 = scalar_select %p74, %s75, %s76
      %p80 = pneg %p74
      %p81 = scmp.eq.s32.totalorder %s16, 1
      %p82 = por %p80, %p81
      %p83 = scmp.ne.s32.totalorder %s75, %s78
      %p84 = scmp.eq.s32.totalorder %s16, 0
      %p85 = por %p83, %p84
      %p86 = scmp.ne.s32.totalorder %s75, %s78
      %p87 = scmp.eq.s32.totalorder %s21, 1
      %p88 = por %p86, %p87
      %p89 = scmp.ne.s32.totalorder %s78, %s79
      %p90 = scmp.eq.s32.totalorder %s21, 0
      %p91 = por %p89, %p90
      %p92 = scmp.ne.s32.totalorder %s78, %s79
      %p93 = scmp.eq.s32.totalorder %s22, 1
      %p94 = por %p92, %p93
      %p96 = scmp.ne.s32.totalorder %s79, %s95
      %p97 = scmp.eq.s32.totalorder %s22, 0
      %p98 = por %p96, %p97
      %s99 = ssub.s32 %s24, %s38
      %p100 = scmp.eq.s32.totalorder %s99, 0
      %s102 = sadd.s32 %s101, 1
      %s103 = scalar_select %p100, %s101, %s102
      %p106 = pneg %p100
      %p107 = scmp.eq.s32.totalorder %s16, 1
      %p108 = por %p106, %p107
      %p109 = scmp.ne.s32.totalorder %s101, %s104
      %p110 = scmp.eq.s32.totalorder %s16, 0
      %p111 = por %p109, %p110
      %p112 = scmp.ne.s32.totalorder %s101, %s104
      %p113 = scmp.eq.s32.totalorder %s21, 1
      %p114 = por %p112, %p113
      %p115 = scmp.ne.s32.totalorder %s104, %s105
      %p116 = scmp.eq.s32.totalorder %s21, 0
      %p117 = por %p115, %p116
      %p118 = scmp.ne.s32.totalorder %s104, %s105
      %p119 = scmp.eq.s32.totalorder %s22, 1
      %p120 = por %p118, %p119
      %p122 = scmp.ne.s32.totalorder %s105, %s121
      %p123 = scmp.eq.s32.totalorder %s22, 0
      %p124 = por %p122, %p123
      %s125 = ssub.s32 %s23, %s42
      %s126 = ssub.s32 %s24, %s38
      %s127 = sor.u32 %s125, %s126
      %p128 = scmp.eq.s32.totalorder %s127, 0
      %s130 = sadd.s32 %s129, 1
      %s131 = scalar_select %p128, %s129, %s130
      %p134 = pneg %p128
      %p135 = scmp.eq.s32.totalorder %s16, 1
      %p136 = por %p134, %p135
      %p137 = scmp.ne.s32.totalorder %s129, %s132
      %p138 = scmp.eq.s32.totalorder %s16, 0
      %p139 = por %p137, %p138
      %p140 = scmp.ne.s32.totalorder %s129, %s132
      %p141 = scmp.eq.s32.totalorder %s21, 1
      %p142 = por %p140, %p141
      %p143 = scmp.ne.s32.totalorder %s132, %s133
      %p144 = scmp.eq.s32.totalorder %s21, 0
      %p145 = por %p143, %p144
      %p146 = scmp.ne.s32.totalorder %s132, %s133
      %p147 = scmp.eq.s32.totalorder %s22, 1
      %p148 = por %p146, %p147
      %p150 = scmp.ne.s32.totalorder %s133, %s149
      %p151 = scmp.eq.s32.totalorder %s22, 0
      %p152 = por %p150, %p151
      %p153 = scmp.le.s32.totalorder 1, %s16
      %p154 = scmp.lt.s32.totalorder %s16, 3
      %p155 = pnand %p153, %p154
      %p156 = pneg %p155
      // Predicated region
      $region9: #{tpu_custom_call.1} parent=5 // pred_check
        _
      $region10: #{tpu_custom_call.1} parent=5 // pred_check_branch
        %158 = sbr.rel (%p155) target = $region12
      $region11: #{tpu_custom_call.1} parent=5 // pred_region
        %s159 = ssub.s32 %s16, 1
        // Predicated region
        $region13: #{tpu_custom_call.1} parent=11 // pred_check
          %p160 = pneg %p63
        $region14: #{tpu_custom_call.1} parent=11 // pred_check_branch
          %162 = sbr.rel (%p160) target = $region16
        $region15: #{tpu_custom_call.1} parent=11 // pred_region
          %s163 = smul.u32 2, %s26
          %s165 = ssub.s32 128, 128
          %166 = vsyncadd [#allocation4], %s165
          %s167 = sadd.s32 %s28, %s163
          %s168 = smul.addr %s167, 64
          %s169 = scalar_lea.hbm %s0, %s168
          %s170 = sshll.u32 [#allocation3], 4
          %s171 = int_to_ptr.vmem [resolvable:$true] %s170
          %176 = dma.hbm_to_vmem [thread:$0]  %s169, 128, %s171, [#allocation4], 64, 64, 4
        $region16: #{tpu_custom_call.1} parent=11 // pred_fallthru
          _
      $region12: #{tpu_custom_call.1} parent=5 // pred_fallthru
        _
      %p177 = scmp.lt.s32.totalorder %s16, 2
      // Predicated region
      $region17: #{tpu_custom_call.1} parent=5 // pred_check
        %p178 = pneg %p177
      $region18: #{tpu_custom_call.1} parent=5 // pred_check_branch
        %180 = sbr.rel (%p178) target = $region20
      $region19: #{tpu_custom_call.1} parent=5 // pred_region
        // Predicated region
        $region21: #{tpu_custom_call.1} parent=19 // pred_check
          %p181 = pneg %p85
        $region22: #{tpu_custom_call.1} parent=19 // pred_check_branch
          %183 = sbr.rel (%p181) target = $region24
        $region23: #{tpu_custom_call.1} parent=19 // pred_region
          %s184 = sand.u32 %s75, 1
          %s185 = scalar_lea.sflag [#allocation7], %s184
          %s186 = sand.u32 %s75, 1
          %s187 = smul.addr %s186, 128
          %s188 = scalar_lea.vmem [#allocation6], %s187
          %s189 = smul.u32 16, %s25
          %s190 = smul.u32 2, %s24
          %s192 = ssub.s32 2048, 2048
          %193 = vsyncadd %s185, %s192
          %s194 = smul.addr %s189, 4
          %s195 = sadd.s32 %s190, %s194
          %s196 = smul.addr %s195, 64
          %s197 = scalar_lea.hbm %s1, %s196
          %s198 = sshll.u32 %s188, 4
          %s199 = int_to_ptr.vmem [resolvable:$true] %s198
          %204 = dma.hbm_to_vmem [thread:$0]  %s197, 2048, %s199, %s185, 256, 128, 8
        $region24: #{tpu_custom_call.1} parent=19 // pred_fallthru
          _
        // Predicated region
        $region25: #{tpu_custom_call.1} parent=19 // pred_check
          %p205 = pneg %p111
        $region26: #{tpu_custom_call.1} parent=19 // pred_check_branch
          %207 = sbr.rel (%p205) target = $region28
        $region27: #{tpu_custom_call.1} parent=19 // pred_region
          %s208 = smul.u32 2, %s24
          %p209 = scmp.lt.s32.totalorder %s208, 3
          %s210 = scalar_select %p209, %s208, 3
          %s211 = scalar_lea.vmem %s2, %s210
          %s212 = smul.u32 2, %s24
        $region28: #{tpu_custom_call.1} parent=19 // pred_fallthru
          _
      $region20: #{tpu_custom_call.1} parent=5 // pred_fallthru
        _
      %p213 = scmp.le.s32.totalorder 1, %s16
      %p214 = scmp.lt.s32.totalorder %s16, 3
      %p215 = pnand %p213, %p214
      %p216 = pneg %p215
      // Predicated region
      $region29: #{tpu_custom_call.1} parent=5 // pred_check
        _
      $region30: #{tpu_custom_call.1} parent=5 // pred_check_branch
        %218 = sbr.rel (%p215) target = $region32
      $region31: #{tpu_custom_call.1} parent=5 // pred_region
        %s219 = ssub.s32 %s16, 1
        // Predicated region
        $region33: #{tpu_custom_call.1} parent=31 // pred_check
          %p220 = pneg %p63
        $region34: #{tpu_custom_call.1} parent=31 // pred_check_branch
          %222 = sbr.rel (%p220) target = $region36
        $region35: #{tpu_custom_call.1} parent=31 // pred_region
          %223 = dma.done [#allocation4], 128
        $region36: #{tpu_custom_call.1} parent=31 // pred_fallthru
          _
        %s224 = sand.u32 %s78, 1
        %s225 = scalar_lea.sflag [#allocation7], %s224
        %s226 = sand.u32 %s78, 1
        %s227 = smul.addr %s226, 128
        %s228 = scalar_lea.vmem [#allocation6], %s227
        // Predicated region
        $region37: #{tpu_custom_call.1} parent=31 // pred_check
          %p229 = pneg %p91
        $region38: #{tpu_custom_call.1} parent=31 // pred_check_branch
          %231 = sbr.rel (%p229) target = $region40
        $region39: #{tpu_custom_call.1} parent=31 // pred_region
          %232 = dma.done %s225, 2048
        $region40: #{tpu_custom_call.1} parent=31 // pred_fallthru
          _
        %p233 = pneg %p63
        %p234 = pneg %p60
        %s235 = sand.u32 %s78, 1
        %s236 = scalar_lea.sflag [#allocation7], %s235
        %s237 = sand.u32 %s78, 1
        %s238 = smul.addr %s237, 128
        %s239 = scalar_lea.vmem [#allocation6], %s238
        %p240 = pneg %p91
        %p241 = pneg %p88
        %s242 = smul.u32 2, %s27
        %p243 = scmp.lt.s32.totalorder %s242, 3
        %s244 = scalar_select %p243, %s242, 3
        %s245 = scalar_lea.vmem %s2, %s244
        %p246 = pneg %p117
        %p247 = pneg %p114
        %p248 = pneg %p145
        %p249 = pneg %p142
        %s250 = sand.u32 %s132, 1
        %s251 = scalar_lea.sflag [#allocation5], %s250
        %s252 = sand.u32 %s132, 1
        %s253 = smul.addr %s252, 32
        %s254 = scalar_lea.vmem [#allocation8], %s253
        %s255 = smul.u32 2, %s26
        %s256 = smul.u32 16, %s28
        %s257 = smul.u32 2, %s27
        %s258 = smul.u32 2, %s27
        %p259 = scmp.lt.s32.totalorder %s258, 3
        %s260 = scalar_select %p259, %s258, 3
        %s261 = scalar_lea.vmem %s2, %s260
        %s262 = smul.u32 2, %s27
        %s263 = smul.u32 2, %s26
        %s264 = smul.u32 2, %s27
        %p266 = scmp.eq.s32.totalorder %s28, 0
        // Predicated region
        $region41: #{tpu_custom_call.1} parent=31 // pred_check
          %p267 = pneg %p266
        $region42: #{tpu_custom_call.1} parent=31 // pred_check_branch
          %269 = sbr.rel (%p267) target = $region44
        $region43: #{tpu_custom_call.1} parent=31 // pred_region
          %270 = vst [vmem:[#allocation2] sm:$0xff] 0.0
          %271 = vst [vmem:[#allocation2 + $0x8] sm:$0xff] 0.0
          %272 = vst [vmem:[#allocation2 + $0x10] sm:$0xff] 0.0
          %273 = vst [vmem:[#allocation2 + $0x18] sm:$0xff] 0.0
        $region44: #{tpu_custom_call.1} parent=31 // pred_fallthru
          _
        %v274 = vld [vmem:[#allocation2] sm:$0xff]
        %v275 = vld [vmem:[#allocation2 + $0x8] sm:$0xff]
        %v276 = vld [vmem:[#allocation2 + $0x10] sm:$0xff]
        %v277 = vld [vmem:[#allocation2 + $0x18] sm:$0xff]
        %v278 = vld [vmem:[#allocation3] sm:$0xf]
        %v279 = vld [vmem:[#allocation3 + $0x4] sm:$0xf]
        %v280 = vld [vmem:[%s228] sm:$0xff]
        %v281 = vld [vmem:[%s228 + $0x8] sm:$0xff]
        %v282 = vld [vmem:[%s228 + $0x10] sm:$0xff]
        %v283 = vld [vmem:[%s228 + $0x18] sm:$0xff]
        %v284 = vld [vmem:[%s228 + $0x20] sm:$0xff]
        %v285 = vld [vmem:[%s228 + $0x28] sm:$0xff]
        %v286 = vld [vmem:[%s228 + $0x30] sm:$0xff]
        %v287 = vld [vmem:[%s228 + $0x38] sm:$0xff]
        %v288 = vld [vmem:[%s228 + $0x40] sm:$0xff]
        %v289 = vld [vmem:[%s228 + $0x48] sm:$0xff]
        %v290 = vld [vmem:[%s228 + $0x50] sm:$0xff]
        %v291 = vld [vmem:[%s228 + $0x58] sm:$0xff]
        %v292 = vld [vmem:[%s228 + $0x60] sm:$0xff]
        %v293 = vld [vmem:[%s228 + $0x68] sm:$0xff]
        %v294 = vld [vmem:[%s228 + $0x70] sm:$0xff]
        %v295 = vld [vmem:[%s228 + $0x78] sm:$0xff]
        %v298 = vunpack.c.l.b16 %v278
        %v299 = vunpack.c.l.b16 %v279
        %v300 = vpack.c.b16 %v299, %v298
        %v318 = vunpack.c.l.b16 %v280
        %v319 = vunpack.c.h.b16 %v280
        %v320 = vunpack.c.l.b16 %v281
        %v321 = vunpack.c.h.b16 %v281
        %v322 = vunpack.c.l.b16 %v282
        %v323 = vunpack.c.h.b16 %v282
        %v324 = vunpack.c.l.b16 %v283
        %v325 = vunpack.c.h.b16 %v283
        %v326 = vunpack.c.l.b16 %v284
        %v327 = vunpack.c.h.b16 %v284
        %v328 = vunpack.c.l.b16 %v285
        %v329 = vunpack.c.h.b16 %v285
        %v330 = vunpack.c.l.b16 %v286
        %v331 = vunpack.c.h.b16 %v286
        %v332 = vunpack.c.l.b16 %v287
        %v333 = vunpack.c.h.b16 %v287
        %v334 = vunpack.c.l.b16 %v288
        %v335 = vunpack.c.h.b16 %v288
        %v336 = vunpack.c.l.b16 %v289
        %v337 = vunpack.c.h.b16 %v289
        %v338 = vunpack.c.l.b16 %v290
        %v339 = vunpack.c.h.b16 %v290
        %v340 = vunpack.c.l.b16 %v291
        %v341 = vunpack.c.h.b16 %v291
        %v342 = vunpack.c.l.b16 %v292
        %v343 = vunpack.c.h.b16 %v292
        %v344 = vunpack.c.l.b16 %v293
        %v345 = vunpack.c.h.b16 %v293
        %v346 = vunpack.c.l.b16 %v294
        %v347 = vunpack.c.h.b16 %v294
        %v348 = vunpack.c.l.b16 %v295
        %v349 = vunpack.c.h.b16 %v295
        %v350 = vpack.c.b16 %v320, %v318
        %v351 = vpack.c.b16 %v321, %v319
        %v352 = vpack.c.b16 %v324, %v322
        %v353 = vpack.c.b16 %v325, %v323
        %v354 = vpack.c.b16 %v328, %v326
        %v355 = vpack.c.b16 %v329, %v327
        %v356 = vpack.c.b16 %v332, %v330
        %v357 = vpack.c.b16 %v333, %v331
        %v358 = vpack.c.b16 %v336, %v334
        %v359 = vpack.c.b16 %v337, %v335
        %v360 = vpack.c.b16 %v340, %v338
        %v361 = vpack.c.b16 %v341, %v339
        %v362 = vpack.c.b16 %v344, %v342
        %v363 = vpack.c.b16 %v345, %v343
        %v364 = vpack.c.b16 %v348, %v346
        %v365 = vpack.c.b16 %v349, %v347
        %382 = vmatprep.subr.bf16.mxu0 %v351
        %383 = vmatpush1.bf16.msra.mxu0 %v350
        %384 = vmatprep.subr.bf16.mxu0 %v353
        %385 = vmatpush1.bf16.msra.mxu0 %v352
        %386 = vmatprep.subr.bf16.mxu0 %v355
        %387 = vmatpush1.bf16.msra.mxu0 %v354
        %388 = vmatprep.subr.bf16.mxu0 %v357
        %389 = vmatpush1.bf16.msra.mxu0 %v356
        %390 = vmatprep.subr.bf16.mxu0 %v359
        %391 = vmatpush1.bf16.msra.mxu0 %v358
        %392 = vmatprep.subr.bf16.mxu0 %v361
        %393 = vmatpush1.bf16.msra.mxu0 %v360
        %394 = vmatprep.subr.bf16.mxu0 %v363
        %395 = vmatpush1.bf16.msra.mxu0 %v362
        %396 = vmatprep.subr.bf16.mxu0 %v365
        %397 = vmatpush1.bf16.msra.mxu0 %v364
        %398 = vmatprep.subr.bf16.mxu0 0
        %399 = vmatpush1.bf16.msra.mxu0 0
        %400 = vmatprep.subr.bf16.mxu0 0
        %401 = vmatpush1.bf16.msra.mxu0 0
        %402 = vmatprep.subr.bf16.mxu0 0
        %403 = vmatpush1.bf16.msra.mxu0 0
        %404 = vmatprep.subr.bf16.mxu0 0
        %405 = vmatpush1.bf16.msra.mxu0 0
        %406 = vmatprep.subr.bf16.mxu0 0
        %407 = vmatpush1.bf16.msra.mxu0 0
        %408 = vmatprep.subr.bf16.mxu0 0
        %409 = vmatpush1.bf16.msra.mxu0 0
        %410 = vmatprep.subr.bf16.mxu0 0
        %411 = vmatpush1.bf16.msra.mxu0 0
        %412 = vmatprep.subr.bf16.mxu0 0
        %413 = vmatpush1.bf16.msra.mxu0 0
        %414 = vmatprep.mubr.bf16.mxu0 0
        %415 = vmatmul.mubr.bf16.gmra.mrb[0].mxu0 %v300
        %v416 = vpop.f32.mrb[0].mxu0
        %v417 = vadd.f32 0.0, %v416
        %v418 = vpop.f32.mrb[0].mxu0
        %v419 = vadd.f32 0.0, %v418
        %v420 = vpop.f32.mrb[0].mxu0
        %v421 = vadd.f32 0.0, %v420
        %v422 = vpop.f32.mrb[0].mxu0
        %v423 = vadd.f32 0.0, %v422
        %424 = vdwg.mxu0
        %v425 = vadd.f32 %v274, %v417
        %v426 = vadd.f32 %v275, %v419
        %v427 = vadd.f32 %v276, %v421
        %v428 = vadd.f32 %v277, %v423
        %429 = vst [vmem:[#allocation2] sm:$0xff] %v425
        %430 = vst [vmem:[#allocation2 + $0x8] sm:$0xff] %v426
        %431 = vst [vmem:[#allocation2 + $0x10] sm:$0xff] %v427
        %432 = vst [vmem:[#allocation2 + $0x18] sm:$0xff] %v428
        // Predicated region
        $region45: #{tpu_custom_call.1} parent=31 // pred_check
          %p433 = pneg %p266
        $region46: #{tpu_custom_call.1} parent=31 // pred_check_branch
          %435 = sbr.rel (%p433) target = $region48
        $region47: #{tpu_custom_call.1} parent=31 // pred_region
          %v436 = vld [vmem:[#allocation2] sm:$0xff]
          %v437 = vld [vmem:[#allocation2 + $0x8] sm:$0xff]
          %v438 = vld [vmem:[#allocation2 + $0x10] sm:$0xff]
          %v439 = vld [vmem:[#allocation2 + $0x18] sm:$0xff]
          %v440 = vld [vmem:[%s261] sm:$0x3]
          %v442 = vlaneseq
          %v443 = vshrl.u32 %v442, 7
          %v444 = vsub.s32 0, %v443
          %v445 = vrot.slane %v440, %v444
          %v446 = vlaneseq
          %v447 = vshrl.u32 %v446, 7
          %v448 = vsub.s32 1, %v447
          %v449 = vrot.slane %v440, %v448
          %v452 = vadd.f32 %v436, %v445
          %v453 = vadd.f32 %v437, %v449
          %v454 = vadd.f32 %v438, %v445
          %v455 = vadd.f32 %v439, %v449
          %456 = vst [vmem:[%s254] sm:$0xff] %v452
          %457 = vst [vmem:[%s254 + $0x8] sm:$0xff] %v453
          %458 = vst [vmem:[%s254 + $0x10] sm:$0xff] %v454
          %459 = vst [vmem:[%s254 + $0x18] sm:$0xff] %v455
        $region48: #{tpu_custom_call.1} parent=31 // pred_fallthru
          _
        %s460 = sand.u32 %s132, 1
        %s461 = scalar_lea.sflag [#allocation5], %s460
        %s462 = sand.u32 %s132, 1
        %s463 = smul.addr %s462, 32
        %s464 = scalar_lea.vmem [#allocation8], %s463
        // Predicated region
        $region49: #{tpu_custom_call.1} parent=31 // pred_check
          %p465 = pneg %p142
        $region50: #{tpu_custom_call.1} parent=31 // pred_check_branch
          %467 = sbr.rel (%p465) target = $region52
        $region51: #{tpu_custom_call.1} parent=31 // pred_region
          %s468 = smul.u32 2, %s26
          %s469 = smul.u32 2, %s27
          %s471 = ssub.s32 512, 512
          %472 = vsyncadd %s461, %s471
          %s473 = smul.addr %s468, 4
          %s474 = sadd.s32 %s469, %s473
          %s475 = smul.addr %s474, 128
          %s476 = scalar_lea.hbm %s3, %s475
          %s477 = sshll.u32 %s464, 4
          %s478 = int_to_ptr.vmem [resolvable:$true] %s477
          %483 = dma.vmem_to_hbm [thread:$0]  %s478, 512, %s476, %s461, 256, 512, 16
        $region52: #{tpu_custom_call.1} parent=31 // pred_fallthru
          _
      $region32: #{tpu_custom_call.1} parent=5 // pred_fallthru
        _
      %p484 = scmp.le.s32.totalorder 2, %s16
      // Predicated region
      $region53: #{tpu_custom_call.1} parent=5 // pred_check
        %p485 = pneg %p484
      $region54: #{tpu_custom_call.1} parent=5 // pred_check_branch
        %487 = sbr.rel (%p485) target = $region56
      $region55: #{tpu_custom_call.1} parent=5 // pred_region
        %s488 = ssub.s32 %s16, 2
        // Predicated region
        $region57: #{tpu_custom_call.1} parent=55 // pred_check
          %p489 = pneg %p148
        $region58: #{tpu_custom_call.1} parent=55 // pred_check_branch
          %491 = sbr.rel (%p489) target = $region60
        $region59: #{tpu_custom_call.1} parent=55 // pred_region
          %s492 = sand.u32 %s133, 1
          %s493 = scalar_lea.sflag [#allocation5], %s492
          %s494 = sand.u32 %s133, 1
          %s495 = smul.addr %s494, 32
          %s496 = scalar_lea.vmem [#allocation8], %s495
          %497 = dma.done %s493, 512
        $region60: #{tpu_custom_call.1} parent=55 // pred_fallthru
          _
      $region56: #{tpu_custom_call.1} parent=5 // pred_fallthru
        _
    $region6: #{tpu_custom_call.1} parent=1 // loop_footer
      %s20 = sadd.s32 1, %s16
    $region7: #{tpu_custom_call.1} parent=1 // loop_footer_branch
      %15 = sbr.rel target = $region3
    $region8: #{tpu_custom_call.1} parent=1 // loop_exit
      _
    %498 = vsyncpa [#allocation4], 1
    %s499 = scalar_lea.sflag [#allocation4], 1
    %500 = vsyncpa %s499, 1
    %501 = vsyncpa [#allocation7], 1
    %s502 = scalar_lea.sflag [#allocation7], 1
    %503 = vsyncpa %s502, 1
    %504 = vsyncpa [#allocation5], 1
    %s505 = scalar_lea.sflag [#allocation5], 1
    %506 = vsyncpa %s505, 1

</llo_original>
